<compile_context>
chip_gen: v7x
topology: tpu7x:2x2x1
jax: 0.10.0
libtpu: 0.0.40
codegen_flags: <defaults>
</compile_context>

<pallas_src>
import math

import jax
import jax.numpy as jnp
from jax.experimental import pallas as pl
from jax.experimental.pallas import tpu as pltpu


def _round_up(x, m):
    return ((x + m - 1) // m) * m


def _sine1d_kernel(z_ref, inv_dimt_ref, phase_ref, o_ref):
    """out[t, m, d] = sin(z[t, m] * inv_dim_t[d] + phase[d]).

    z_ref        : (tT, zM)   lane-dense; zM == 1 (mask=None) or tM (masked)
    inv_dimt_ref : (1, 1, Dp)
    phase_ref    : (1, 1, Dp)
    o_ref        : (tT, tM, Dp)
    """
    z = z_ref[...][:, :, None]                                  # (tT, zM, 1)
    ang = z * inv_dimt_ref[...] + phase_ref[...]                # VPU mul+add -> (tT, zM, Dp)
    out = jnp.sin(ang)                                          # single EUP pass (cos == sin(x+pi/2))
    # Fast path (zM == 1): only tT*Dp sines computed; broadcast across the Q*B
    # sublanes happens *after* the transcendental.
    o_ref[...] = jnp.broadcast_to(out, o_ref.shape).astype(o_ref.dtype)


def position_embedding_sine_1d(x, mask=None, *, num_pos_feats=64,
                               temperature=10000.0, normalize=False, scale=None):
    """Pallas equivalent of PositionEmbeddingSine1D.forward.

    Args:
      x:    (T, Q, B, C) array (only its shape is used).
      mask: optional (T, Q, B) bool array. None -> no padding.
    Returns:
      (T, Q, B, 2 * num_pos_feats) float32 positional embedding.
    """
    if scale is not None and not normalize:
        raise ValueError("normalize should be True if scale is passed")
    if scale is None:
        scale = 2 * math.pi

    T, Q, B, _ = x.shape
    D = 2 * num_pos_feats
    Dp = _round_up(D, 128)            # lane-dense output width (unmasked stores)
    M = Q * B
    eps = 1e-6

    # ---- feature-axis tables (trace-time constants), shaped (1, 1, Dp) ----
    d = jnp.arange(Dp, dtype=jnp.float32)
    dim_t = temperature ** (2.0 * jnp.floor(d * 0.5) / D)
    inv_dim_t = (1.0 / dim_t).reshape(1, 1, Dp)                 # multiply, not divide, in-kernel
    phase = ((d % 2.0) * (0.5 * math.pi)).reshape(1, 1, Dp)     # even lane -> sin, odd -> cos

    # ---- z (cumulative temporal position), lane-dense 2-D ----
    if mask is None:
        # Positions do not depend on (q, b): a (T, 1) column is enough, the
        # kernel broadcasts it across the Q*B sublanes.
        z = jnp.arange(1, T + 1, dtype=jnp.float32)
        if normalize:
            z = z / (T + eps) * scale
        z = z.reshape(T, 1)
    else:
        not_mask = jnp.logical_not(mask).astype(jnp.float32).reshape(T, M)
        z = jnp.cumsum(not_mask, axis=0)                        # O(T*M): 1/D of the output work
        if normalize:
            z = z / (z[-1:, :] + eps) * scale                   # same op order as reference

    # ---- tile sizes ----
    bytes_per_row = Dp * 4                                      # one (q, b) row of output features
    # Output-block budget (double-buffered). Fast path is purely store-bound ->
    # bigger blocks; masked path also streams z and runs a sine per element.
    # VMEM accounting (worst case): 2*budget (out) + 2*~budget/128 (lane-dense z)
    # + ~16 KiB tables <= ~16.3 MiB, well under the explicit 32 MiB limit below
    # (v7x: 64 MiB physical; v5e/v6e: 128 MiB physical).
    budget = (8 if mask is None else 6) * 1024 * 1024
    total_bytes = T * M * bytes_per_row

    if total_bytes <= budget:
        tT, tM = T, M
    elif 8 * M * bytes_per_row <= budget:
        # Full-M tiles (one contiguous HBM run per T row); tT a multiple of 8
        # keeps the (tT, tM) z block legal under the (8,128) rule.
        tM = M
        tT = min(T, (budget // (M * bytes_per_row)) // 8 * 8)
    else:
        # Very fat rows: tile along M too (masked-path z block needs tM % 128 == 0).
        tT = min(T, 8)
        align = 8 if mask is None else 128
        tM = min(M, max(align, (budget // (tT * bytes_per_row)) // align * align))

    # Guarantee >= 2 grid steps on non-tiny problems so both v7x TensorCores
    # get work ("parallel" semantics only helps with >= 2 blocks).
    if tT == T and tM == M and total_bytes >= 512 * 1024:
        if T >= 9:
            tT = _round_up(pl.cdiv(T, 2), 8)
        elif mask is None and M >= 9:
            tM = _round_up(pl.cdiv(M, 2), 8)
        elif mask is not None and M >= 129:
            tM = _round_up(pl.cdiv(M, 2), 128)

    grid = (pl.cdiv(T, tT), pl.cdiv(M, tM))

    if mask is None:
        z_spec = pl.BlockSpec((tT, 1), lambda i, j: (i, 0))
    else:
        z_spec = pl.BlockSpec((tT, tM), lambda i, j: (i, j))

    out = pl.pallas_call(
        _sine1d_kernel,
        out_shape=jax.ShapeDtypeStruct((T, M, Dp), jnp.float32),
        grid_spec=pltpu.PrefetchScalarGridSpec(
            num_scalar_prefetch=0,
            grid=grid,
            in_specs=[
                z_spec,
                pl.BlockSpec((1, 1, Dp), lambda i, j: (0, 0, 0)),
                pl.BlockSpec((1, 1, Dp), lambda i, j: (0, 0, 0)),
            ],
            out_specs=pl.BlockSpec((tT, tM, Dp), lambda i, j: (i, j, 0)),
        ),
        compiler_params=pltpu.CompilerParams(
            dimension_semantics=("parallel", "parallel"),
            vmem_limit_bytes=32 * 1024 * 1024,
        ),
    )(z, inv_dim_t, phase)

    if Dp != D:
        out = out[:, :, :D]          # drop lane padding (no-op for default D=128)
    return out.reshape(T, Q, B, D)


def _reference(x, mask=None, *, num_pos_feats=64, temperature=10000.0,
               normalize=False, scale=None):
    """Pure-JAX re-implementation of the PyTorch forward (for verification)."""
    if scale is None:
        scale = 2 * math.pi
    T, Q, B, _ = x.shape
    if mask is None:
        mask = jnp.zeros((T, Q, B), dtype=bool)
    not_mask = ~mask
    z = jnp.cumsum(not_mask.astype(jnp.float32), axis=0)
    if normalize:
        eps = 1e-6
        z = z / (z[-1:, :, :] + eps) * scale
    D = num_pos_feats * 2
    d = jnp.arange(D, dtype=jnp.float32)
    dim_t = temperature ** (2.0 * jnp.floor(d / 2.0) / D)
    pos = z[:, :, :, None] / dim_t
    pos = jnp.stack((jnp.sin(pos[..., 0::2]), jnp.cos(pos[..., 1::2])), axis=4)
    return pos.reshape(T, Q, B, D)


if __name__ == "__main__":
    key = jax.random.PRNGKey(0)
    k_x, k_len = jax.random.split(key)

    T, Q, B = 8, 5, 2
    num_pos_feats = 64                 # module default -> feature dim = 128 (lane-dense)
    C = 2 * num_pos_feats              # output has "the same shape of x"

    x = jax.random.normal(k_x, (T, Q, B, C), dtype=jnp.float32)

    # Case 1: default (mask=None, normalize=False) -> fast path.
    out1 = jax.block_until_ready(position_embedding_sine_1d(x, num_pos_feats=num_pos_feats))
    ref1 = _reference(x, num_pos_feats=num_pos_feats)
    assert out1.shape == (T, Q, B, 2 * num_pos_feats)
    assert jnp.allclose(out1, ref1, atol=1e-5, rtol=1e-5)

    # Case 2: temporal padding mask + normalize=True (masked, lane-dense-z path).
    lengths = jax.random.randint(k_len, (Q, B), minval=1, maxval=T + 1)   # >=1 valid frame
    mask = jnp.arange(T)[:, None, None] >= lengths[None, :, :]            # (T, Q, B) bool
    out2 = jax.block_until_ready(
        position_embedding_sine_1d(x, mask, num_pos_feats=num_pos_feats, normalize=True))
    ref2 = _reference(x, mask, num_pos_feats=num_pos_feats, normalize=True)
    assert jnp.allclose(out2, ref2, atol=1e-5, rtol=1e-5)

    # Case 3: non-multiple-of-128 feature width (D=64) -> exercises lane padding + slice.
    x3 = x[..., :64]
    out3 = jax.block_until_ready(
        position_embedding_sine_1d(x3, mask, num_pos_feats=32, normalize=True))
    ref3 = _reference(x3, mask, num_pos_feats=32, normalize=True)
    assert out3.shape == (T, Q, B, 64)
    assert jnp.allclose(out3, ref3, atol=1e-5, rtol=1e-5)

    print("KERNEL_OK")
</pallas_src>

<mosaic_0001>
module attributes {stable_mosaic.version = 11 : i64} {
  func.func @_sine1d_kernel(%arg0: i32, %arg1: i32, %arg2: memref<8x1xf32, #tpu.memory_space<vmem>>, %arg3: memref<1x1x128xf32, #tpu.memory_space<vmem>>, %arg4: memref<1x1x128xf32, #tpu.memory_space<vmem>>, %arg5: memref<8x10x128xf32, #tpu.memory_space<vmem>>) attributes {dimension_semantics = [#tpu.dimension_semantics<parallel>, #tpu.dimension_semantics<parallel>], iteration_bounds = array<i64: 1, 1>, scalar_prefetch = 0 : i64, scratch_operands = 0 : i64, tpu.core_type = #tpu.core_type<tc>, window_params = [{transform_indices = @transform_0, window_bounds = array<i64: 8, 1>}, {pipeline_mode = #tpu.pipeline_mode<synchronous>, transform_indices = @transform_1, window_bounds = array<i64: 1, 1, 128>}, {pipeline_mode = #tpu.pipeline_mode<synchronous>, transform_indices = @transform_2, window_bounds = array<i64: 1, 1, 128>}, {transform_indices = @transform_3, window_bounds = array<i64: 8, 10, 128>}]} {
    %c0 = arith.constant 0 : index
    %c0_0 = arith.constant 0 : index
    %0 = vector.load %arg2[%c0, %c0_0] : memref<8x1xf32, #tpu.memory_space<vmem>>, vector<8x1xf32>
    %1 = vector.shape_cast %0 : vector<8x1xf32> to vector<8x1x1xf32>
    %c0_1 = arith.constant 0 : index
    %c0_2 = arith.constant 0 : index
    %c0_3 = arith.constant 0 : index
    %2 = vector.load %arg3[%c0_1, %c0_2, %c0_3] : memref<1x1x128xf32, #tpu.memory_space<vmem>>, vector<1x1x128xf32>
    %3 = vector.broadcast %1 : vector<8x1x1xf32> to vector<8x1x128xf32>
    %4 = vector.broadcast %2 : vector<1x1x128xf32> to vector<8x1x128xf32>
    %5 = arith.mulf %3, %4 : vector<8x1x128xf32>
    %c0_4 = arith.constant 0 : index
    %c0_5 = arith.constant 0 : index
    %c0_6 = arith.constant 0 : index
    %6 = vector.load %arg4[%c0_4, %c0_5, %c0_6] : memref<1x1x128xf32, #tpu.memory_space<vmem>>, vector<1x1x128xf32>
    %7 = vector.broadcast %6 : vector<1x1x128xf32> to vector<8x1x128xf32>
    %8 = arith.addf %5, %7 : vector<8x1x128xf32>
    %9 = math.sin %8 : vector<8x1x128xf32>
    %10 = vector.shape_cast %9 : vector<8x1x128xf32> to vector<8x1x128xf32>
    %11 = vector.broadcast %10 : vector<8x1x128xf32> to vector<8x10x128xf32>
    %c0_7 = arith.constant 0 : index
    %c0_8 = arith.constant 0 : index
    %c0_9 = arith.constant 0 : index
    %12 = vector.load %arg5[%c0_7, %c0_8, %c0_9] : memref<8x10x128xf32, #tpu.memory_space<vmem>>, vector<8x10x128xf32>
    tpu.vector_store %arg5[%c0_7, %c0_8, %c0_9], %11 {strides = array<i32>} : memref<8x10x128xf32, #tpu.memory_space<vmem>>, vector<8x10x128xf32>,
    return
  }
  func.func @transform_0(%arg0: i32, %arg1: i32) -> (i32, i32) {
    %c0_i32 = arith.constant 0 : i32
    %c0_i32_0 = arith.constant 0 : i32
    return %arg0, %c0_i32 : i32, i32
  }
  func.func @transform_1(%arg0: i32, %arg1: i32) -> (i32, i32, i32) {
    %c0_i32 = arith.constant 0 : i32
    %c0_i32_0 = arith.constant 0 : i32
    %c0_i32_1 = arith.constant 0 : i32
    %c0_i32_2 = arith.constant 0 : i32
    return %c0_i32, %c0_i32_0, %c0_i32_1 : i32, i32, i32
  }
  func.func @transform_2(%arg0: i32, %arg1: i32) -> (i32, i32, i32) {
    %c0_i32 = arith.constant 0 : i32
    %c0_i32_0 = arith.constant 0 : i32
    %c0_i32_1 = arith.constant 0 : i32
    %c0_i32_2 = arith.constant 0 : i32
    return %c0_i32, %c0_i32_0, %c0_i32_1 : i32, i32, i32
  }
  func.func @transform_3(%arg0: i32, %arg1: i32) -> (i32, i32, i32) {
    %c0_i32 = arith.constant 0 : i32
    %c0_i32_0 = arith.constant 0 : i32
    return %arg0, %arg1, %c0_i32 : i32, i32, i32
  }
}

</mosaic_0001>

<llo_original>
// kernel: tpu_custom_call.1
$region0: #{tpu_custom_call.1}
  #allocation0 [shape = 'u32[]', space=smem, size = 0x4, offset = 0x4, fixed_abs, tag = 'smem constant byte address 0x4 - core index']
  #allocation1 [shape = 'u32[144,128]{1,0:T(1,128)}', space=vmem, size = 0x12000, scoped, tag = 'internal scratch']
  %s0 = inlined_call_operand.vmem [shape: f32[8,1], index: 0, kind: input, shape index: {}]
  %s1 = inlined_call_operand.vmem [shape: f32[1,1,128], index: 1, kind: input, shape index: {}]
  %s2 = inlined_call_operand.vmem [shape: f32[1,1,128], index: 2, kind: input, shape index: {}]
  %s3 = inlined_call_operand.vmem [shape: f32[8,10,128], index: 3, kind: output, shape index: {}]
  %s4 = sld [smem:[#allocation0]]
  $region22: #{tpu_custom_call.1} parent=0
    _
  %s6 = ssub.s32 1, %s4
  %s7 = scalar_select 0, %s6, %s4
  // Predicated region
  $region2: #{tpu_custom_call.1} parent=0 // pred_check
    _
  $region3: #{tpu_custom_call.1} parent=0 // pred_check_branch
    %9 = sbr.rel (0) target = $region5
  $region4: #{tpu_custom_call.1} parent=0 // pred_region
    _
  $region5: #{tpu_custom_call.1} parent=0 // pred_fallthru
    _
  // Predicated region
  $region6: #{tpu_custom_call.1} parent=0 // pred_check
    _
  $region7: #{tpu_custom_call.1} parent=0 // pred_check_branch
    %11 = sbr.rel (0) target = $region9
  $region8: #{tpu_custom_call.1} parent=0 // pred_region
    _
  $region9: #{tpu_custom_call.1} parent=0 // pred_fallthru
    _
  // Predicated region
  $region10: #{tpu_custom_call.1} parent=0 // pred_check
    _
  $region11: #{tpu_custom_call.1} parent=0 // pred_check_branch
    %13 = sbr.rel (0) target = $region13
  $region12: #{tpu_custom_call.1} parent=0 // pred_region
    _
  $region13: #{tpu_custom_call.1} parent=0 // pred_fallthru
    _
  %v14 = vld [vmem:[%s0] sm:$0xff]
  %v16 = vcombine.high %v14, %v14
  %v18 = vunpack.c.l.s4 1966171168
  %v19 = vunpack.c.0.s8 %v18
  %v20 = vlaneseq
  %v21 = vshrl.u32 %v20, 7
  %v22 = vsub.s32 %v19, %v21
  %v23 = vrot.slane %v14, %v22
  %v25 = vunpack.c.l.s4 1966171168
  %v26 = vunpack.c.0.s8 %v25
  %v27 = vlaneseq
  %v28 = vshrl.u32 %v27, 7
  %v29 = vsub.s32 %v26, %v28
  %v30 = vrot.slane %v16, %v29
  %v31 = vcombine.high %v23, %v23
  %v32 = vcombine.high %v30, %v30
  %v34 = vunpack.c.l.s4 1966171168
  %v35 = vunpack.c.0.s8 %v34
  %v36 = vlaneseq
  %v37 = vshrl.u32 %v36, 7
  %v38 = vsub.s32 %v35, %v37
  %v39 = vrot.slane %v23, %v38
  %v41 = vunpack.c.l.s4 1966171168
  %v42 = vunpack.c.0.s8 %v41
  %v43 = vlaneseq
  %v44 = vshrl.u32 %v43, 7
  %v45 = vsub.s32 %v42, %v44
  %v46 = vrot.slane %v30, %v45
  %v48 = vunpack.c.l.s4 1966171168
  %v49 = vunpack.c.0.s8 %v48
  %v50 = vlaneseq
  %v51 = vshrl.u32 %v50, 7
  %v52 = vsub.s32 %v49, %v51
  %v53 = vrot.slane %v31, %v52
  %v55 = vunpack.c.l.s4 1966171168
  %v56 = vunpack.c.0.s8 %v55
  %v57 = vlaneseq
  %v58 = vshrl.u32 %v57, 7
  %v59 = vsub.s32 %v56, %v58
  %v60 = vrot.slane %v32, %v59
  %v61 = vcombine.high %v39, %v39
  %v62 = vcombine.high %v46, %v46
  %v63 = vcombine.high %v53, %v53
  %v64 = vcombine.high %v60, %v60
  %v65 = vld [vmem:[%s1] sm:$0x1]
  %66 = vset.pattern.permute.xlu0 0
  %67 = vperm.xlu0 %66, %v39
  %v68 = vpop.permute.xlu0 %67
  %v70 = vlaneseq
  %v71 = vshrl.u32 %v70, 7
  %v72 = vsub.s32 0, %v71
  %v73 = vrot.slane %v68, %v72
  %74 = vset.pattern.permute.xlu0 0
  %75 = vperm.xlu0 %74, %v53
  %v76 = vpop.permute.xlu0 %75
  %v78 = vlaneseq
  %v79 = vshrl.u32 %v78, 7
  %v80 = vsub.s32 0, %v79
  %v81 = vrot.slane %v76, %v80
  %82 = vset.pattern.permute.xlu0 0
  %83 = vperm.xlu0 %82, %v61
  %v84 = vpop.permute.xlu0 %83
  %v86 = vlaneseq
  %v87 = vshrl.u32 %v86, 7
  %v88 = vsub.s32 0, %v87
  %v89 = vrot.slane %v84, %v88
  %90 = vset.pattern.permute.xlu0 0
  %91 = vperm.xlu0 %90, %v63
  %v92 = vpop.permute.xlu0 %91
  %v94 = vlaneseq
  %v95 = vshrl.u32 %v94, 7
  %v96 = vsub.s32 0, %v95
  %v97 = vrot.slane %v92, %v96
  %98 = vset.pattern.permute.xlu0 0
  %99 = vperm.xlu0 %98, %v46
  %v100 = vpop.permute.xlu0 %99
  %v102 = vlaneseq
  %v103 = vshrl.u32 %v102, 7
  %v104 = vsub.s32 0, %v103
  %v105 = vrot.slane %v100, %v104
  %106 = vset.pattern.permute.xlu0 0
  %107 = vperm.xlu0 %106, %v60
  %v108 = vpop.permute.xlu0 %107
  %v110 = vlaneseq
  %v111 = vshrl.u32 %v110, 7
  %v112 = vsub.s32 0, %v111
  %v113 = vrot.slane %v108, %v112
  %114 = vset.pattern.permute.xlu0 0
  %115 = vperm.xlu0 %114, %v62
  %v116 = vpop.permute.xlu0 %115
  %v118 = vlaneseq
  %v119 = vshrl.u32 %v118, 7
  %v120 = vsub.s32 0, %v119
  %v121 = vrot.slane %v116, %v120
  %122 = vset.pattern.permute.xlu0 0
  %123 = vperm.xlu0 %122, %v64
  %v124 = vpop.permute.xlu0 %123
  %v126 = vlaneseq
  %v127 = vshrl.u32 %v126, 7
  %v128 = vsub.s32 0, %v127
  %v129 = vrot.slane %v124, %v128
  %v130 = vmul.f32 %v73, %v65
  %v131 = vmul.f32 %v81, %v65
  %v132 = vmul.f32 %v89, %v65
  %v133 = vmul.f32 %v97, %v65
  %v134 = vmul.f32 %v105, %v65
  %v135 = vmul.f32 %v113, %v65
  %v136 = vmul.f32 %v121, %v65
  %v137 = vmul.f32 %v129, %v65
  %v138 = vld [vmem:[%s2] sm:$0x1]
  %v139 = vadd.f32 %v130, %v138
  %v140 = vadd.f32 %v131, %v138
  %v141 = vadd.f32 %v132, %v138
  %v142 = vadd.f32 %v133, %v138
  %v143 = vadd.f32 %v134, %v138
  %v144 = vadd.f32 %v135, %v138
  %v145 = vadd.f32 %v136, %v138
  %v146 = vadd.f32 %v137, %v138
  %v147 = vand.u32 2147483647, %v139
  %vm148 = vcmp.le.f32.partialorder %v147, 0.7853982
  %vm149 = vcmp.lt.s32.totalorder %v139, 0
  %v150 = vand.u32 %v139, 2139095040
  %v151 = vshrl.u32 %v150, 23
  %v152 = vsub.s32 %v151, 127
  %v153 = vand.u32 2147483647, %v139
  %v154 = vand.u32 %v153, 8388607
  %v155 = vor.u32 %v154, 8388608
  %v156 = vsub.s32 0, %v155
  %v157 = vadd.s32 %v152, 1
  %vm158 = vcmp.gt.s32.totalorder %v157, 0
  %v159 = vsel %vm158, %v157, 0
  %v160 = vshrl.u32 %v159, 5
  %v161 = vand.u32 %v159, 31
  %v162 = vsub.s32 32, %v161
  %v163 = vshrl.u32 683565275, %v162
  %v164 = vshll.u32 683565275, %v161
  %v165 = vshrl.u32 2475754826, %v162
  %v166 = vor.u32 %v164, %v165
  %v167 = vshll.u32 2475754826, %v161
  %v168 = vshrl.u32 2131351028, %v162
  %v169 = vor.u32 %v167, %v168
  %v170 = vshll.u32 2131351028, %v161
  %v171 = vshrl.u32 2102212464, %v162
  %v172 = vor.u32 %v170, %v171
  %v173 = vshll.u32 2102212464, %v161
  %v174 = vshrl.u32 920167782, %v162
  %v175 = vor.u32 %v173, %v174
  %v176 = vshll.u32 920167782, %v161
  %v177 = vshrl.u32 1326507024, %v162
  %v178 = vor.u32 %v176, %v177
  %vm179 = vcmp.lt.s32.totalorder %v160, 1
  %vm180 = vcmp.lt.s32.totalorder %v160, 2
  %vm181 = vcmp.lt.s32.totalorder %v160, 3
  %vm182 = vcmp.lt.s32.totalorder %v160, 4
  %v183 = vsel %vm179, %v163, %v166
  %v184 = vsel %vm182, %v172, 2102212464
  %v185 = vsel %vm181, %v169, %v184
  %v186 = vsel %vm180, %v183, %v185
  %v187 = vsel %vm179, %v166, %v169
  %v188 = vsel %vm182, %v175, 920167782
  %v189 = vsel %vm181, %v172, %v188
  %v190 = vsel %vm180, %v187, %v189
  %v191 = vsel %vm179, %v169, %v172
  %v192 = vsel %vm182, %v178, 1326507024
  %v193 = vsel %vm181, %v175, %v192
  %v194 = vsel %vm180, %v191, %v193
  %v195 = vshll.u32 %v155, 8
  %v196 = vmul.u32.u64.compose %v195, %v194
  %v197 = vextract.low.u32 %v196
  %v198 = vextract.high.u32 %v196
  %v199 = vmul.u32.u64.compose %v195, %v190
  %v200 = vextract.low.u32 %v199
  %v201 = vextract.high.u32 %v199
  %v202 = vmul.u32 %v195, %v186
  %v203 = vadd.s32 %v198, %v200
  %vm204 = vc.u32 %v198, %v200
  %v205 = vadd.s32 %v201, 1
  %v206 = vsel %vm204, %v205, %v201
  %v207 = vadd.s32 %v202, %v206
  %v208 = vadd.s32 %v207, 536870912
  %v209 = vshrl.u32 %v208, 30
  %v210 = vshll.u32 %v209, 30
  %v211 = vsub.s32 %v207, %v210
  %vm212 = vcmp.lt.s32.totalorder %v211, 0
  %v213 = vsub.s32 0, %v211
  %v214 = vsel %vm212, %v213, %v211
  %v215 = vclz %v214
  %v216 = vsub.s32 %v215, 2
  %vm217 = vcmp.gt.s32.totalorder 0, %v216
  %v218 = vsel %vm217, 0, %v216
  %v219 = vsub.s32 32, %v218
  %v220 = vshll.u32 %v211, %v218
  %v221 = vshrl.u32 %v203, %v219
  %v222 = vor.u32 %v220, %v221
  %v223 = vsub.s32 4294967266, %v218
  %v224 = vadd.s32 %v223, 127
  %v225 = vshll.u32 %v224, 23
  %v226 = vor.u32 4788187, %v225
  %v227 = vand.u32 2147483647, %v226
  %v229 = vcvt.s32.f32 %v222
  %v230 = vmul.f32 %v229, %v227
  %v231 = vxor.u32 %v230, 2147483648
  %v232 = vsel %vm149, %v231, %v230
  %v233 = vsub.s32 4, %v209
  %v234 = vsel %vm149, %v233, %v209
  %v235 = vsel %vm148, %v139, %v232
  %v236 = vsel %vm148, 0, %v234
  %v237 = vcosq.f32.pop %v235
  %v238 = vsinq.f32.pop %v235
  %vm239 = vweird.f32 %v139
  %v240 = vadd.s32 %v236, 3
  %v241 = vand.u32 %v240, 3
  %vm242 = vcmp.lt.s32.totalorder %v241, 2
  %vm243 = vcmp.eq.s32.totalorder %v241, 0
  %v244 = vxor.u32 %v238, 2147483648
  %v245 = vsel %vm243, %v237, %v244
  %vm246 = vcmp.eq.s32.totalorder %v241, 2
  %v247 = vxor.u32 %v237, 2147483648
  %v248 = vsel %vm246, %v247, %v238
  %v249 = vsel %vm242, %v245, %v248
  %v250 = vsel %vm239, nan, %v249
  %v251 = vand.u32 2147483647, %v140
  %vm252 = vcmp.le.f32.partialorder %v251, 0.7853982
  %vm253 = vcmp.lt.s32.totalorder %v140, 0
  %v254 = vand.u32 %v140, 2139095040
  %v255 = vshrl.u32 %v254, 23
  %v256 = vsub.s32 %v255, 127
  %v257 = vand.u32 2147483647, %v140
  %v258 = vand.u32 %v257, 8388607
  %v259 = vor.u32 %v258, 8388608
  %v260 = vsub.s32 0, %v259
  %v261 = vadd.s32 %v256, 1
  %vm262 = vcmp.gt.s32.totalorder %v261, 0
  %v263 = vsel %vm262, %v261, 0
  %v264 = vshrl.u32 %v263, 5
  %v265 = vand.u32 %v263, 31
  %v266 = vsub.s32 32, %v265
  %v267 = vshrl.u32 683565275, %v266
  %v268 = vshll.u32 683565275, %v265
  %v269 = vshrl.u32 2475754826, %v266
  %v270 = vor.u32 %v268, %v269
  %v271 = vshll.u32 2475754826, %v265
  %v272 = vshrl.u32 2131351028, %v266
  %v273 = vor.u32 %v271, %v272
  %v274 = vshll.u32 2131351028, %v265
  %v275 = vshrl.u32 2102212464, %v266
  %v276 = vor.u32 %v274, %v275
  %v277 = vshll.u32 2102212464, %v265
  %v278 = vshrl.u32 920167782, %v266
  %v279 = vor.u32 %v277, %v278
  %v280 = vshll.u32 920167782, %v265
  %v281 = vshrl.u32 1326507024, %v266
  %v282 = vor.u32 %v280, %v281
  %vm283 = vcmp.lt.s32.totalorder %v264, 1
  %vm284 = vcmp.lt.s32.totalorder %v264, 2
  %vm285 = vcmp.lt.s32.totalorder %v264, 3
  %vm286 = vcmp.lt.s32.totalorder %v264, 4
  %v287 = vsel %vm283, %v267, %v270
  %v288 = vsel %vm286, %v276, 2102212464
  %v289 = vsel %vm285, %v273, %v288
  %v290 = vsel %vm284, %v287, %v289
  %v291 = vsel %vm283, %v270, %v273
  %v292 = vsel %vm286, %v279, 920167782
  %v293 = vsel %vm285, %v276, %v292
  %v294 = vsel %vm284, %v291, %v293
  %v295 = vsel %vm283, %v273, %v276
  %v296 = vsel %vm286, %v282, 1326507024
  %v297 = vsel %vm285, %v279, %v296
  %v298 = vsel %vm284, %v295, %v297
  %v299 = vshll.u32 %v259, 8
  %v300 = vmul.u32.u64.compose %v299, %v298
  %v301 = vextract.low.u32 %v300
  %v302 = vextract.high.u32 %v300
  %v303 = vmul.u32.u64.compose %v299, %v294
  %v304 = vextract.low.u32 %v303
  %v305 = vextract.high.u32 %v303
  %v306 = vmul.u32 %v299, %v290
  %v307 = vadd.s32 %v302, %v304
  %vm308 = vc.u32 %v302, %v304
  %v309 = vadd.s32 %v305, 1
  %v310 = vsel %vm308, %v309, %v305
  %v311 = vadd.s32 %v306, %v310
  %v312 = vadd.s32 %v311, 536870912
  %v313 = vshrl.u32 %v312, 30
  %v314 = vshll.u32 %v313, 30
  %v315 = vsub.s32 %v311, %v314
  %vm316 = vcmp.lt.s32.totalorder %v315, 0
  %v317 = vsub.s32 0, %v315
  %v318 = vsel %vm316, %v317, %v315
  %v319 = vclz %v318
  %v320 = vsub.s32 %v319, 2
  %vm321 = vcmp.gt.s32.totalorder 0, %v320
  %v322 = vsel %vm321, 0, %v320
  %v323 = vsub.s32 32, %v322
  %v324 = vshll.u32 %v315, %v322
  %v325 = vshrl.u32 %v307, %v323
  %v326 = vor.u32 %v324, %v325
  %v327 = vsub.s32 4294967266, %v322
  %v328 = vadd.s32 %v327, 127
  %v329 = vshll.u32 %v328, 23
  %v330 = vor.u32 4788187, %v329
  %v331 = vand.u32 2147483647, %v330
  %v333 = vcvt.s32.f32 %v326
  %v334 = vmul.f32 %v333, %v331
  %v335 = vxor.u32 %v334, 2147483648
  %v336 = vsel %vm253, %v335, %v334
  %v337 = vsub.s32 4, %v313
  %v338 = vsel %vm253, %v337, %v313
  %v339 = vsel %vm252, %v140, %v336
  %v340 = vsel %vm252, 0, %v338
  %v341 = vcosq.f32.pop %v339
  %v342 = vsinq.f32.pop %v339
  %vm343 = vweird.f32 %v140
  %v344 = vadd.s32 %v340, 3
  %v345 = vand.u32 %v344, 3
  %vm346 = vcmp.lt.s32.totalorder %v345, 2
  %vm347 = vcmp.eq.s32.totalorder %v345, 0
  %v348 = vxor.u32 %v342, 2147483648
  %v349 = vsel %vm347, %v341, %v348
  %vm350 = vcmp.eq.s32.totalorder %v345, 2
  %v351 = vxor.u32 %v341, 2147483648
  %v352 = vsel %vm350, %v351, %v342
  %v353 = vsel %vm346, %v349, %v352
  %v354 = vsel %vm343, nan, %v353
  %v355 = vand.u32 2147483647, %v141
  %vm356 = vcmp.le.f32.partialorder %v355, 0.7853982
  %vm357 = vcmp.lt.s32.totalorder %v141, 0
  %v358 = vand.u32 %v141, 2139095040
  %v359 = vshrl.u32 %v358, 23
  %v360 = vsub.s32 %v359, 127
  %v361 = vand.u32 2147483647, %v141
  %v362 = vand.u32 %v361, 8388607
  %v363 = vor.u32 %v362, 8388608
  %v364 = vsub.s32 0, %v363
  %v365 = vadd.s32 %v360, 1
  %vm366 = vcmp.gt.s32.totalorder %v365, 0
  %v367 = vsel %vm366, %v365, 0
  %v368 = vshrl.u32 %v367, 5
  %v369 = vand.u32 %v367, 31
  %v370 = vsub.s32 32, %v369
  %v371 = vshrl.u32 683565275, %v370
  %v372 = vshll.u32 683565275, %v369
  %v373 = vshrl.u32 2475754826, %v370
  %v374 = vor.u32 %v372, %v373
  %v375 = vshll.u32 2475754826, %v369
  %v376 = vshrl.u32 2131351028, %v370
  %v377 = vor.u32 %v375, %v376
  %v378 = vshll.u32 2131351028, %v369
  %v379 = vshrl.u32 2102212464, %v370
  %v380 = vor.u32 %v378, %v379
  %v381 = vshll.u32 2102212464, %v369
  %v382 = vshrl.u32 920167782, %v370
  %v383 = vor.u32 %v381, %v382
  %v384 = vshll.u32 920167782, %v369
  %v385 = vshrl.u32 1326507024, %v370
  %v386 = vor.u32 %v384, %v385
  %vm387 = vcmp.lt.s32.totalorder %v368, 1
  %vm388 = vcmp.lt.s32.totalorder %v368, 2
  %vm389 = vcmp.lt.s32.totalorder %v368, 3
  %vm390 = vcmp.lt.s32.totalorder %v368, 4
  %v391 = vsel %vm387, %v371, %v374
  %v392 = vsel %vm390, %v380, 2102212464
  %v393 = vsel %vm389, %v377, %v392
  %v394 = vsel %vm388, %v391, %v393
  %v395 = vsel %vm387, %v374, %v377
  %v396 = vsel %vm390, %v383, 920167782
  %v397 = vsel %vm389, %v380, %v396
  %v398 = vsel %vm388, %v395, %v397
  %v399 = vsel %vm387, %v377, %v380
  %v400 = vsel %vm390, %v386, 1326507024
  %v401 = vsel %vm389, %v383, %v400
  %v402 = vsel %vm388, %v399, %v401
  %v403 = vshll.u32 %v363, 8
  %v404 = vmul.u32.u64.compose %v403, %v402
  %v405 = vextract.low.u32 %v404
  %v406 = vextract.high.u32 %v404
  %v407 = vmul.u32.u64.compose %v403, %v398
  %v408 = vextract.low.u32 %v407
  %v409 = vextract.high.u32 %v407
  %v410 = vmul.u32 %v403, %v394
  %v411 = vadd.s32 %v406, %v408
  %vm412 = vc.u32 %v406, %v408
  %v413 = vadd.s32 %v409, 1
  %v414 = vsel %vm412, %v413, %v409
  %v415 = vadd.s32 %v410, %v414
  %v416 = vadd.s32 %v415, 536870912
  %v417 = vshrl.u32 %v416, 30
  %v418 = vshll.u32 %v417, 30
  %v419 = vsub.s32 %v415, %v418
  %vm420 = vcmp.lt.s32.totalorder %v419, 0
  %v421 = vsub.s32 0, %v419
  %v422 = vsel %vm420, %v421, %v419
  %v423 = vclz %v422
  %v424 = vsub.s32 %v423, 2
  %vm425 = vcmp.gt.s32.totalorder 0, %v424
  %v426 = vsel %vm425, 0, %v424
  %v427 = vsub.s32 32, %v426
  %v428 = vshll.u32 %v419, %v426
  %v429 = vshrl.u32 %v411, %v427
  %v430 = vor.u32 %v428, %v429
  %v431 = vsub.s32 4294967266, %v426
  %v432 = vadd.s32 %v431, 127
  %v433 = vshll.u32 %v432, 23
  %v434 = vor.u32 4788187, %v433
  %v435 = vand.u32 2147483647, %v434
  %v437 = vcvt.s32.f32 %v430
  %v438 = vmul.f32 %v437, %v435
  %v439 = vxor.u32 %v438, 2147483648
  %v440 = vsel %vm357, %v439, %v438
  %v441 = vsub.s32 4, %v417
  %v442 = vsel %vm357, %v441, %v417
  %v443 = vsel %vm356, %v141, %v440
  %v444 = vsel %vm356, 0, %v442
  %v445 = vcosq.f32.pop %v443
  %v446 = vsinq.f32.pop %v443
  %vm447 = vweird.f32 %v141
  %v448 = vadd.s32 %v444, 3
  %v449 = vand.u32 %v448, 3
  %vm450 = vcmp.lt.s32.totalorder %v449, 2
  %vm451 = vcmp.eq.s32.totalorder %v449, 0
  %v452 = vxor.u32 %v446, 2147483648
  %v453 = vsel %vm451, %v445, %v452
  %vm454 = vcmp.eq.s32.totalorder %v449, 2
  %v455 = vxor.u32 %v445, 2147483648
  %v456 = vsel %vm454, %v455, %v446
  %v457 = vsel %vm450, %v453, %v456
  %v458 = vsel %vm447, nan, %v457
  %v459 = vand.u32 2147483647, %v142
  %vm460 = vcmp.le.f32.partialorder %v459, 0.7853982
  %vm461 = vcmp.lt.s32.totalorder %v142, 0
  %v462 = vand.u32 %v142, 2139095040
  %v463 = vshrl.u32 %v462, 23
  %v464 = vsub.s32 %v463, 127
  %v465 = vand.u32 2147483647, %v142
  %v466 = vand.u32 %v465, 8388607
  %v467 = vor.u32 %v466, 8388608
  %v468 = vsub.s32 0, %v467
  %v469 = vadd.s32 %v464, 1
  %vm470 = vcmp.gt.s32.totalorder %v469, 0
  %v471 = vsel %vm470, %v469, 0
  %v472 = vshrl.u32 %v471, 5
  %v473 = vand.u32 %v471, 31
  %v474 = vsub.s32 32, %v473
  %v475 = vshrl.u32 683565275, %v474
  %v476 = vshll.u32 683565275, %v473
  %v477 = vshrl.u32 2475754826, %v474
  %v478 = vor.u32 %v476, %v477
  %v479 = vshll.u32 2475754826, %v473
  %v480 = vshrl.u32 2131351028, %v474
  %v481 = vor.u32 %v479, %v480
  %v482 = vshll.u32 2131351028, %v473
  %v483 = vshrl.u32 2102212464, %v474
  %v484 = vor.u32 %v482, %v483
  %v485 = vshll.u32 2102212464, %v473
  %v486 = vshrl.u32 920167782, %v474
  %v487 = vor.u32 %v485, %v486
  %v488 = vshll.u32 920167782, %v473
  %v489 = vshrl.u32 1326507024, %v474
  %v490 = vor.u32 %v488, %v489
  %vm491 = vcmp.lt.s32.totalorder %v472, 1
  %vm492 = vcmp.lt.s32.totalorder %v472, 2
  %vm493 = vcmp.lt.s32.totalorder %v472, 3
  %vm494 = vcmp.lt.s32.totalorder %v472, 4
  %v495 = vsel %vm491, %v475, %v478
  %v496 = vsel %vm494, %v484, 2102212464
  %v497 = vsel %vm493, %v481, %v496
  %v498 = vsel %vm492, %v495, %v497
  %v499 = vsel %vm491, %v478, %v481
  %v500 = vsel %vm494, %v487, 920167782
  %v501 = vsel %vm493, %v484, %v500
  %v502 = vsel %vm492, %v499, %v501
  %v503 = vsel %vm491, %v481, %v484
  %v504 = vsel %vm494, %v490, 1326507024
  %v505 = vsel %vm493, %v487, %v504
  %v506 = vsel %vm492, %v503, %v505
  %v507 = vshll.u32 %v467, 8
  %v508 = vmul.u32.u64.compose %v507, %v506
  %v509 = vextract.low.u32 %v508
  %v510 = vextract.high.u32 %v508
  %v511 = vmul.u32.u64.compose %v507, %v502
  %v512 = vextract.low.u32 %v511
  %v513 = vextract.high.u32 %v511
  %v514 = vmul.u32 %v507, %v498
  %v515 = vadd.s32 %v510, %v512
  %vm516 = vc.u32 %v510, %v512
  %v517 = vadd.s32 %v513, 1
  %v518 = vsel %vm516, %v517, %v513
  %v519 = vadd.s32 %v514, %v518
  %v520 = vadd.s32 %v519, 536870912
  %v521 = vshrl.u32 %v520, 30
  %v522 = vshll.u32 %v521, 30
  %v523 = vsub.s32 %v519, %v522
  %vm524 = vcmp.lt.s32.totalorder %v523, 0
  %v525 = vsub.s32 0, %v523
  %v526 = vsel %vm524, %v525, %v523
  %v527 = vclz %v526
  %v528 = vsub.s32 %v527, 2
  %vm529 = vcmp.gt.s32.totalorder 0, %v528
  %v530 = vsel %vm529, 0, %v528
  %v531 = vsub.s32 32, %v530
  %v532 = vshll.u32 %v523, %v530
  %v533 = vshrl.u32 %v515, %v531
  %v534 = vor.u32 %v532, %v533
  %v535 = vsub.s32 4294967266, %v530
  %v536 = vadd.s32 %v535, 127
  %v537 = vshll.u32 %v536, 23
  %v538 = vor.u32 4788187, %v537
  %v539 = vand.u32 2147483647, %v538
  %v541 = vcvt.s32.f32 %v534
  %v542 = vmul.f32 %v541, %v539
  %v543 = vxor.u32 %v542, 2147483648
  %v544 = vsel %vm461, %v543, %v542
  %v545 = vsub.s32 4, %v521
  %v546 = vsel %vm461, %v545, %v521
  %v547 = vsel %vm460, %v142, %v544
  %v548 = vsel %vm460, 0, %v546
  %v549 = vcosq.f32.pop %v547
  %v550 = vsinq.f32.pop %v547
  %vm551 = vweird.f32 %v142
  %v552 = vadd.s32 %v548, 3
  %v553 = vand.u32 %v552, 3
  %vm554 = vcmp.lt.s32.totalorder %v553, 2
  %vm555 = vcmp.eq.s32.totalorder %v553, 0
  %v556 = vxor.u32 %v550, 2147483648
  %v557 = vsel %vm555, %v549, %v556
  %vm558 = vcmp.eq.s32.totalorder %v553, 2
  %v559 = vxor.u32 %v549, 2147483648
  %v560 = vsel %vm558, %v559, %v550
  %v561 = vsel %vm554, %v557, %v560
  %v562 = vsel %vm551, nan, %v561
  %v563 = vand.u32 2147483647, %v143
  %vm564 = vcmp.le.f32.partialorder %v563, 0.7853982
  %vm565 = vcmp.lt.s32.totalorder %v143, 0
  %v566 = vand.u32 %v143, 2139095040
  %v567 = vshrl.u32 %v566, 23
  %v568 = vsub.s32 %v567, 127
  %v569 = vand.u32 2147483647, %v143
  %v570 = vand.u32 %v569, 8388607
  %v571 = vor.u32 %v570, 8388608
  %v572 = vsub.s32 0, %v571
  %v573 = vadd.s32 %v568, 1
  %vm574 = vcmp.gt.s32.totalorder %v573, 0
  %v575 = vsel %vm574, %v573, 0
  %v576 = vshrl.u32 %v575, 5
  %v577 = vand.u32 %v575, 31
  %v578 = vsub.s32 32, %v577
  %v579 = vshrl.u32 683565275, %v578
  %v580 = vshll.u32 683565275, %v577
  %v581 = vshrl.u32 2475754826, %v578
  %v582 = vor.u32 %v580, %v581
  %v583 = vshll.u32 2475754826, %v577
  %v584 = vshrl.u32 2131351028, %v578
  %v585 = vor.u32 %v583, %v584
  %v586 = vshll.u32 2131351028, %v577
  %v587 = vshrl.u32 2102212464, %v578
  %v588 = vor.u32 %v586, %v587
  %v589 = vshll.u32 2102212464, %v577
  %v590 = vshrl.u32 920167782, %v578
  %v591 = vor.u32 %v589, %v590
  %v592 = vshll.u32 920167782, %v577
  %v593 = vshrl.u32 1326507024, %v578
  %v594 = vor.u32 %v592, %v593
  %vm595 = vcmp.lt.s32.totalorder %v576, 1
  %vm596 = vcmp.lt.s32.totalorder %v576, 2
  %vm597 = vcmp.lt.s32.totalorder %v576, 3
  %vm598 = vcmp.lt.s32.totalorder %v576, 4
  %v599 = vsel %vm595, %v579, %v582
  %v600 = vsel %vm598, %v588, 2102212464
  %v601 = vsel %vm597, %v585, %v600
  %v602 = vsel %vm596, %v599, %v601
  %v603 = vsel %vm595, %v582, %v585
  %v604 = vsel %vm598, %v591, 920167782
  %v605 = vsel %vm597, %v588, %v604
  %v606 = vsel %vm596, %v603, %v605
  %v607 = vsel %vm595, %v585, %v588
  %v608 = vsel %vm598, %v594, 1326507024
  %v609 = vsel %vm597, %v591, %v608
  %v610 = vsel %vm596, %v607, %v609
  %v611 = vshll.u32 %v571, 8
  %v612 = vmul.u32.u64.compose %v611, %v610
  %v613 = vextract.low.u32 %v612
  %v614 = vextract.high.u32 %v612
  %v615 = vmul.u32.u64.compose %v611, %v606
  %v616 = vextract.low.u32 %v615
  %v617 = vextract.high.u32 %v615
  %v618 = vmul.u32 %v611, %v602
  %v619 = vadd.s32 %v614, %v616
  %vm620 = vc.u32 %v614, %v616
  %v621 = vadd.s32 %v617, 1
  %v622 = vsel %vm620, %v621, %v617
  %v623 = vadd.s32 %v618, %v622
  %v624 = vadd.s32 %v623, 536870912
  %v625 = vshrl.u32 %v624, 30
  %v626 = vshll.u32 %v625, 30
  %v627 = vsub.s32 %v623, %v626
  %vm628 = vcmp.lt.s32.totalorder %v627, 0
  %v629 = vsub.s32 0, %v627
  %v630 = vsel %vm628, %v629, %v627
  %v631 = vclz %v630
  %v632 = vsub.s32 %v631, 2
  %vm633 = vcmp.gt.s32.totalorder 0, %v632
  %v634 = vsel %vm633, 0, %v632
  %v635 = vsub.s32 32, %v634
  %v636 = vshll.u32 %v627, %v634
  %v637 = vshrl.u32 %v619, %v635
  %v638 = vor.u32 %v636, %v637
  %v639 = vsub.s32 4294967266, %v634
  %v640 = vadd.s32 %v639, 127
  %v641 = vshll.u32 %v640, 23
  %v642 = vor.u32 4788187, %v641
  %v643 = vand.u32 2147483647, %v642
  %v645 = vcvt.s32.f32 %v638
  %v646 = vmul.f32 %v645, %v643
  %v647 = vxor.u32 %v646, 2147483648
  %v648 = vsel %vm565, %v647, %v646
  %v649 = vsub.s32 4, %v625
  %v650 = vsel %vm565, %v649, %v625
  %v651 = vsel %vm564, %v143, %v648
  %v652 = vsel %vm564, 0, %v650
  %v653 = vcosq.f32.pop %v651
  %v654 = vsinq.f32.pop %v651
  %vm655 = vweird.f32 %v143
  %v656 = vadd.s32 %v652, 3
  %v657 = vand.u32 %v656, 3
  %vm658 = vcmp.lt.s32.totalorder %v657, 2
  %vm659 = vcmp.eq.s32.totalorder %v657, 0
  %v660 = vxor.u32 %v654, 2147483648
  %v661 = vsel %vm659, %v653, %v660
  %vm662 = vcmp.eq.s32.totalorder %v657, 2
  %v663 = vxor.u32 %v653, 2147483648
  %v664 = vsel %vm662, %v663, %v654
  %v665 = vsel %vm658, %v661, %v664
  %v666 = vsel %vm655, nan, %v665
  %v667 = vand.u32 2147483647, %v144
  %vm668 = vcmp.le.f32.partialorder %v667, 0.7853982
  %vm669 = vcmp.lt.s32.totalorder %v144, 0
  %v670 = vand.u32 %v144, 2139095040
  %v671 = vshrl.u32 %v670, 23
  %v672 = vsub.s32 %v671, 127
  %v673 = vand.u32 2147483647, %v144
  %v674 = vand.u32 %v673, 8388607
  %v675 = vor.u32 %v674, 8388608
  %v676 = vsub.s32 0, %v675
  %v677 = vadd.s32 %v672, 1
  %vm678 = vcmp.gt.s32.totalorder %v677, 0
  %v679 = vsel %vm678, %v677, 0
  %v680 = vshrl.u32 %v679, 5
  %v681 = vand.u32 %v679, 31
  %v682 = vsub.s32 32, %v681
  %v683 = vshrl.u32 683565275, %v682
  %v684 = vshll.u32 683565275, %v681
  %v685 = vshrl.u32 2475754826, %v682
  %v686 = vor.u32 %v684, %v685
  %v687 = vshll.u32 2475754826, %v681
  %v688 = vshrl.u32 2131351028, %v682
  %v689 = vor.u32 %v687, %v688
  %v690 = vshll.u32 2131351028, %v681
  %v691 = vshrl.u32 2102212464, %v682
  %v692 = vor.u32 %v690, %v691
  %v693 = vshll.u32 2102212464, %v681
  %v694 = vshrl.u32 920167782, %v682
  %v695 = vor.u32 %v693, %v694
  %v696 = vshll.u32 920167782, %v681
  %v697 = vshrl.u32 1326507024, %v682
  %v698 = vor.u32 %v696, %v697
  %vm699 = vcmp.lt.s32.totalorder %v680, 1
  %vm700 = vcmp.lt.s32.totalorder %v680, 2
  %vm701 = vcmp.lt.s32.totalorder %v680, 3
  %vm702 = vcmp.lt.s32.totalorder %v680, 4
  %v703 = vsel %vm699, %v683, %v686
  %v704 = vsel %vm702, %v692, 2102212464
  %v705 = vsel %vm701, %v689, %v704
  %v706 = vsel %vm700, %v703, %v705
  %v707 = vsel %vm699, %v686, %v689
  %v708 = vsel %vm702, %v695, 920167782
  %v709 = vsel %vm701, %v692, %v708
  %v710 = vsel %vm700, %v707, %v709
  %v711 = vsel %vm699, %v689, %v692
  %v712 = vsel %vm702, %v698, 1326507024
  %v713 = vsel %vm701, %v695, %v712
  %v714 = vsel %vm700, %v711, %v713
  %v715 = vshll.u32 %v675, 8
  %v716 = vmul.u32.u64.compose %v715, %v714
  %v717 = vextract.low.u32 %v716
  %v718 = vextract.high.u32 %v716
  %v719 = vmul.u32.u64.compose %v715, %v710
  %v720 = vextract.low.u32 %v719
  %v721 = vextract.high.u32 %v719
  %v722 = vmul.u32 %v715, %v706
  %v723 = vadd.s32 %v718, %v720
  %vm724 = vc.u32 %v718, %v720
  %v725 = vadd.s32 %v721, 1
  %v726 = vsel %vm724, %v725, %v721
  %v727 = vadd.s32 %v722, %v726
  %v728 = vadd.s32 %v727, 536870912
  %v729 = vshrl.u32 %v728, 30
  %v730 = vshll.u32 %v729, 30
  %v731 = vsub.s32 %v727, %v730
  %vm732 = vcmp.lt.s32.totalorder %v731, 0
  %v733 = vsub.s32 0, %v731
  %v734 = vsel %vm732, %v733, %v731
  %v735 = vclz %v734
  %v736 = vsub.s32 %v735, 2
  %vm737 = vcmp.gt.s32.totalorder 0, %v736
  %v738 = vsel %vm737, 0, %v736
  %v739 = vsub.s32 32, %v738
  %v740 = vshll.u32 %v731, %v738
  %v741 = vshrl.u32 %v723, %v739
  %v742 = vor.u32 %v740, %v741
  %v743 = vsub.s32 4294967266, %v738
  %v744 = vadd.s32 %v743, 127
  %v745 = vshll.u32 %v744, 23
  %v746 = vor.u32 4788187, %v745
  %v747 = vand.u32 2147483647, %v746
  %v749 = vcvt.s32.f32 %v742
  %v750 = vmul.f32 %v749, %v747
  %v751 = vxor.u32 %v750, 2147483648
  %v752 = vsel %vm669, %v751, %v750
  %v753 = vsub.s32 4, %v729
  %v754 = vsel %vm669, %v753, %v729
  %v755 = vsel %vm668, %v144, %v752
  %v756 = vsel %vm668, 0, %v754
  %v757 = vcosq.f32.pop %v755
  %v758 = vsinq.f32.pop %v755
  %vm759 = vweird.f32 %v144
  %v760 = vadd.s32 %v756, 3
  %v761 = vand.u32 %v760, 3
  %vm762 = vcmp.lt.s32.totalorder %v761, 2
  %vm763 = vcmp.eq.s32.totalorder %v761, 0
  %v764 = vxor.u32 %v758, 2147483648
  %v765 = vsel %vm763, %v757, %v764
  %vm766 = vcmp.eq.s32.totalorder %v761, 2
  %v767 = vxor.u32 %v757, 2147483648
  %v768 = vsel %vm766, %v767, %v758
  %v769 = vsel %vm762, %v765, %v768
  %v770 = vsel %vm759, nan, %v769
  %v771 = vand.u32 2147483647, %v145
  %vm772 = vcmp.le.f32.partialorder %v771, 0.7853982
  %vm773 = vcmp.lt.s32.totalorder %v145, 0
  %v774 = vand.u32 %v145, 2139095040
  %v775 = vshrl.u32 %v774, 23
  %v776 = vsub.s32 %v775, 127
  %v777 = vand.u32 2147483647, %v145
  %v778 = vand.u32 %v777, 8388607
  %v779 = vor.u32 %v778, 8388608
  %v780 = vsub.s32 0, %v779
  %v781 = vadd.s32 %v776, 1
  %vm782 = vcmp.gt.s32.totalorder %v781, 0
  %v783 = vsel %vm782, %v781, 0
  %v784 = vshrl.u32 %v783, 5
  %v785 = vand.u32 %v783, 31
  %v786 = vsub.s32 32, %v785
  %v787 = vshrl.u32 683565275, %v786
  %v788 = vshll.u32 683565275, %v785
  %v789 = vshrl.u32 2475754826, %v786
  %v790 = vor.u32 %v788, %v789
  %v791 = vshll.u32 2475754826, %v785
  %v792 = vshrl.u32 2131351028, %v786
  %v793 = vor.u32 %v791, %v792
  %v794 = vshll.u32 2131351028, %v785
  %v795 = vshrl.u32 2102212464, %v786
  %v796 = vor.u32 %v794, %v795
  %v797 = vshll.u32 2102212464, %v785
  %v798 = vshrl.u32 920167782, %v786
  %v799 = vor.u32 %v797, %v798
  %v800 = vshll.u32 920167782, %v785
  %v801 = vshrl.u32 1326507024, %v786
  %v802 = vor.u32 %v800, %v801
  %vm803 = vcmp.lt.s32.totalorder %v784, 1
  %vm804 = vcmp.lt.s32.totalorder %v784, 2
  %vm805 = vcmp.lt.s32.totalorder %v784, 3
  %vm806 = vcmp.lt.s32.totalorder %v784, 4
  %v807 = vsel %vm803, %v787, %v790
  %v808 = vsel %vm806, %v796, 2102212464
  %v809 = vsel %vm805, %v793, %v808
  %v810 = vsel %vm804, %v807, %v809
  %v811 = vsel %vm803, %v790, %v793
  %v812 = vsel %vm806, %v799, 920167782
  %v813 = vsel %vm805, %v796, %v812
  %v814 = vsel %vm804, %v811, %v813
  %v815 = vsel %vm803, %v793, %v796
  %v816 = vsel %vm806, %v802, 1326507024
  %v817 = vsel %vm805, %v799, %v816
  %v818 = vsel %vm804, %v815, %v817
  %v819 = vshll.u32 %v779, 8
  %v820 = vmul.u32.u64.compose %v819, %v818
  %v821 = vextract.low.u32 %v820
  %v822 = vextract.high.u32 %v820
  %v823 = vmul.u32.u64.compose %v819, %v814
  %v824 = vextract.low.u32 %v823
  %v825 = vextract.high.u32 %v823
  %v826 = vmul.u32 %v819, %v810
  %v827 = vadd.s32 %v822, %v824
  %vm828 = vc.u32 %v822, %v824
  %v829 = vadd.s32 %v825, 1
  %v830 = vsel %vm828, %v829, %v825
  %v831 = vadd.s32 %v826, %v830
  %v832 = vadd.s32 %v831, 536870912
  %v833 = vshrl.u32 %v832, 30
  %v834 = vshll.u32 %v833, 30
  %v835 = vsub.s32 %v831, %v834
  %vm836 = vcmp.lt.s32.totalorder %v835, 0
  %v837 = vsub.s32 0, %v835
  %v838 = vsel %vm836, %v837, %v835
  %v839 = vclz %v838
  %v840 = vsub.s32 %v839, 2
  %vm841 = vcmp.gt.s32.totalorder 0, %v840
  %v842 = vsel %vm841, 0, %v840
  %v843 = vsub.s32 32, %v842
  %v844 = vshll.u32 %v835, %v842
  %v845 = vshrl.u32 %v827, %v843
  %v846 = vor.u32 %v844, %v845
  %v847 = vsub.s32 4294967266, %v842
  %v848 = vadd.s32 %v847, 127
  %v849 = vshll.u32 %v848, 23
  %v850 = vor.u32 4788187, %v849
  %v851 = vand.u32 2147483647, %v850
  %v853 = vcvt.s32.f32 %v846
  %v854 = vmul.f32 %v853, %v851
  %v855 = vxor.u32 %v854, 2147483648
  %v856 = vsel %vm773, %v855, %v854
  %v857 = vsub.s32 4, %v833
  %v858 = vsel %vm773, %v857, %v833
  %v859 = vsel %vm772, %v145, %v856
  %v860 = vsel %vm772, 0, %v858
  %v861 = vcosq.f32.pop %v859
  %v862 = vsinq.f32.pop %v859
  %vm863 = vweird.f32 %v145
  %v864 = vadd.s32 %v860, 3
  %v865 = vand.u32 %v864, 3
  %vm866 = vcmp.lt.s32.totalorder %v865, 2
  %vm867 = vcmp.eq.s32.totalorder %v865, 0
  %v868 = vxor.u32 %v862, 2147483648
  %v869 = vsel %vm867, %v861, %v868
  %vm870 = vcmp.eq.s32.totalorder %v865, 2
  %v871 = vxor.u32 %v861, 2147483648
  %v872 = vsel %vm870, %v871, %v862
  %v873 = vsel %vm866, %v869, %v872
  %v874 = vsel %vm863, nan, %v873
  %v875 = vand.u32 2147483647, %v146
  %vm876 = vcmp.le.f32.partialorder %v875, 0.7853982
  %vm877 = vcmp.lt.s32.totalorder %v146, 0
  %v878 = vand.u32 %v146, 2139095040
  %v879 = vshrl.u32 %v878, 23
  %v880 = vsub.s32 %v879, 127
  %v881 = vand.u32 2147483647, %v146
  %v882 = vand.u32 %v881, 8388607
  %v883 = vor.u32 %v882, 8388608
  %v884 = vsub.s32 0, %v883
  %v885 = vadd.s32 %v880, 1
  %vm886 = vcmp.gt.s32.totalorder %v885, 0
  %v887 = vsel %vm886, %v885, 0
  %v888 = vshrl.u32 %v887, 5
  %v889 = vand.u32 %v887, 31
  %v890 = vsub.s32 32, %v889
  %v891 = vshrl.u32 683565275, %v890
  %v892 = vshll.u32 683565275, %v889
  %v893 = vshrl.u32 2475754826, %v890
  %v894 = vor.u32 %v892, %v893
  %v895 = vshll.u32 2475754826, %v889
  %v896 = vshrl.u32 2131351028, %v890
  %v897 = vor.u32 %v895, %v896
  %v898 = vshll.u32 2131351028, %v889
  %v899 = vshrl.u32 2102212464, %v890
  %v900 = vor.u32 %v898, %v899
  %v901 = vshll.u32 2102212464, %v889
  %v902 = vshrl.u32 920167782, %v890
  %v903 = vor.u32 %v901, %v902
  %v904 = vshll.u32 920167782, %v889
  %v905 = vshrl.u32 1326507024, %v890
  %v906 = vor.u32 %v904, %v905
  %vm907 = vcmp.lt.s32.totalorder %v888, 1
  %vm908 = vcmp.lt.s32.totalorder %v888, 2
  %vm909 = vcmp.lt.s32.totalorder %v888, 3
  %vm910 = vcmp.lt.s32.totalorder %v888, 4
  %v911 = vsel %vm907, %v891, %v894
  %v912 = vsel %vm910, %v900, 2102212464
  %v913 = vsel %vm909, %v897, %v912
  %v914 = vsel %vm908, %v911, %v913
  %v915 = vsel %vm907, %v894, %v897
  %v916 = vsel %vm910, %v903, 920167782
  %v917 = vsel %vm909, %v900, %v916
  %v918 = vsel %vm908, %v915, %v917
  %v919 = vsel %vm907, %v897, %v900
  %v920 = vsel %vm910, %v906, 1326507024
  %v921 = vsel %vm909, %v903, %v920
  %v922 = vsel %vm908, %v919, %v921
  %v923 = vshll.u32 %v883, 8
  %v924 = vmul.u32.u64.compose %v923, %v922
  %v925 = vextract.low.u32 %v924
  %v926 = vextract.high.u32 %v924
  %v927 = vmul.u32.u64.compose %v923, %v918
  %v928 = vextract.low.u32 %v927
  %v929 = vextract.high.u32 %v927
  %v930 = vmul.u32 %v923, %v914
  %v931 = vadd.s32 %v926, %v928
  %vm932 = vc.u32 %v926, %v928
  %v933 = vadd.s32 %v929, 1
  %v934 = vsel %vm932, %v933, %v929
  %v935 = vadd.s32 %v930, %v934
  %v936 = vadd.s32 %v935, 536870912
  %v937 = vshrl.u32 %v936, 30
  %v938 = vshll.u32 %v937, 30
  %v939 = vsub.s32 %v935, %v938
  %vm940 = vcmp.lt.s32.totalorder %v939, 0
  %v941 = vsub.s32 0, %v939
  %v942 = vsel %vm940, %v941, %v939
  %v943 = vclz %v942
  %v944 = vsub.s32 %v943, 2
  %vm945 = vcmp.gt.s32.totalorder 0, %v944
  %v946 = vsel %vm945, 0, %v944
  %v947 = vsub.s32 32, %v946
  %v948 = vshll.u32 %v939, %v946
  %v949 = vshrl.u32 %v931, %v947
  %v950 = vor.u32 %v948, %v949
  %v951 = vsub.s32 4294967266, %v946
  %v952 = vadd.s32 %v951, 127
  %v953 = vshll.u32 %v952, 23
  %v954 = vor.u32 4788187, %v953
  %v955 = vand.u32 2147483647, %v954
  %v957 = vcvt.s32.f32 %v950
  %v958 = vmul.f32 %v957, %v955
  %v959 = vxor.u32 %v958, 2147483648
  %v960 = vsel %vm877, %v959, %v958
  %v961 = vsub.s32 4, %v937
  %v962 = vsel %vm877, %v961, %v937
  %v963 = vsel %vm876, %v146, %v960
  %v964 = vsel %vm876, 0, %v962
  %v965 = vcosq.f32.pop %v963
  %v966 = vsinq.f32.pop %v963
  %vm967 = vweird.f32 %v146
  %v968 = vadd.s32 %v964, 3
  %v969 = vand.u32 %v968, 3
  %vm970 = vcmp.lt.s32.totalorder %v969, 2
  %vm971 = vcmp.eq.s32.totalorder %v969, 0
  %v972 = vxor.u32 %v966, 2147483648
  %v973 = vsel %vm971, %v965, %v972
  %vm974 = vcmp.eq.s32.totalorder %v969, 2
  %v975 = vxor.u32 %v965, 2147483648
  %v976 = vsel %vm974, %v975, %v966
  %v977 = vsel %vm970, %v973, %v976
  %v978 = vsel %vm967, nan, %v977
  %v987 = vlaneseq
  %v988 = vshrl.u32 %v987, 7
  %v989 = vsub.s32 0, %v988
  %v990 = vrot.slane %v250, %v989
  %v991 = vlaneseq
  %v992 = vshrl.u32 %v991, 7
  %v993 = vsub.s32 0, %v992
  %v994 = vrot.slane %v354, %v993
  %v995 = vlaneseq
  %v996 = vshrl.u32 %v995, 7
  %v997 = vsub.s32 0, %v996
  %v998 = vrot.slane %v458, %v997
  %v999 = vlaneseq
  %v1000 = vshrl.u32 %v999, 7
  %v1001 = vsub.s32 0, %v1000
  %v1002 = vrot.slane %v562, %v1001
  %v1003 = vlaneseq
  %v1004 = vshrl.u32 %v1003, 7
  %v1005 = vsub.s32 0, %v1004
  %v1006 = vrot.slane %v666, %v1005
  %v1007 = vlaneseq
  %v1008 = vshrl.u32 %v1007, 7
  %v1009 = vsub.s32 0, %v1008
  %v1010 = vrot.slane %v770, %v1009
  %v1011 = vlaneseq
  %v1012 = vshrl.u32 %v1011, 7
  %v1013 = vsub.s32 0, %v1012
  %v1014 = vrot.slane %v874, %v1013
  %v1015 = vlaneseq
  %v1016 = vshrl.u32 %v1015, 7
  %v1017 = vsub.s32 0, %v1016
  %v1018 = vrot.slane %v978, %v1017
  %1027 = vst [vmem:[%s3] sm:$0xff] %v990
  %1028 = vst [vmem:[%s3 + $0x8] sm:$0x3] %v990
  %1029 = vst [vmem:[%s3 + $0x10] sm:$0xff] %v994
  %1030 = vst [vmem:[%s3 + $0x18] sm:$0x3] %v994
  %1031 = vst [vmem:[%s3 + $0x20] sm:$0xff] %v998
  %1032 = vst [vmem:[%s3 + $0x28] sm:$0x3] %v998
  %1033 = vst [vmem:[%s3 + $0x30] sm:$0xff] %v1002
  %1034 = vst [vmem:[%s3 + $0x38] sm:$0x3] %v1002
  %1035 = vst [vmem:[%s3 + $0x40] sm:$0xff] %v1006
  %1036 = vst [vmem:[%s3 + $0x48] sm:$0x3] %v1006
  %1037 = vst [vmem:[%s3 + $0x50] sm:$0xff] %v1010
  %1038 = vst [vmem:[%s3 + $0x58] sm:$0x3] %v1010
  %1039 = vst [vmem:[%s3 + $0x60] sm:$0xff] %v1014
  %1040 = vst [vmem:[%s3 + $0x68] sm:$0x3] %v1014
  %1041 = vst [vmem:[%s3 + $0x70] sm:$0xff] %v1018
  %1042 = vst [vmem:[%s3 + $0x78] sm:$0x3] %v1018
  // Predicated region
  $region14: #{tpu_custom_call.1} parent=0 // pred_check
    _
  $region15: #{tpu_custom_call.1} parent=0 // pred_check_branch
    %1044 = sbr.rel (0) target = $region17
  $region16: #{tpu_custom_call.1} parent=0 // pred_region
    _
  $region17: #{tpu_custom_call.1} parent=0 // pred_fallthru
    _
  // Predicated region
  $region18: #{tpu_custom_call.1} parent=0 // pred_check
    _
  $region19: #{tpu_custom_call.1} parent=0 // pred_check_branch
    %1046 = sbr.rel (0) target = $region21
  $region20: #{tpu_custom_call.1} parent=0 // pred_region
    _
  $region21: #{tpu_custom_call.1} parent=0 // pred_fallthru
    _

</llo_original>
